<compile_context>
chip_gen: v7x
topology: tpu7x:2x2x1
jax: 0.10.0
libtpu: 0.0.40
codegen_flags: <defaults>
</compile_context>

<pallas_src>
import functools
import math

import jax
import jax.numpy as jnp
from jax.experimental import pallas as pl
from jax.experimental.pallas import tpu as pltpu

VOCAB = 512
N_POS = 128
D_MODEL = 128
N_LAYER = 2
N_HEAD = 4
HEAD_DIM = D_MODEL // N_HEAD
LN_EPS = 1e-5

# Explicit scoped-VMEM cap (v5e default is only 16 MiB).  Safe on v4..v7x;
# at the real GPT-2 config this would be tuned per generation.
_VMEM_LIMIT_BYTES = 32 * 1024 * 1024


def _pick_tile(dim, prefs):
    for p in prefs:
        if dim >= p and dim % p == 0:
            return p
    return dim


def _tile_m(m):      # sublane (row) tile
    return _pick_tile(m, (256, 128, 64, 32, 16, 8))


def _tile_n(n):      # lane (output-feature) tile — 256 = one v6e/v7x MXU tile
    return _pick_tile(n, (256, 128))


def _tile_k(k):      # contraction tile for the accumulated matmuls
    return _pick_tile(k, (256, 128))


# --------------------- fused LayerNorm + matmul (+ GELU) ---------------------
def _ln_matmul_kernel(x_ref, g_ref, bln_ref, w_ref, b_ref, o_ref, xln_ref,
                      *, activation):
    # y = LN(x) @ W + b (+ gelu_new).  LN is computed once per row tile
    # (j == 0) in f32, cached as bf16 in scratch, reused for every N tile.
    @pl.when(pl.program_id(1) == 0)
    def _():
        x = x_ref[...]
        mu = jnp.mean(x, axis=-1, keepdims=True)
        var = jnp.mean(jnp.square(x - mu), axis=-1, keepdims=True)
        xn = (x - mu) * jax.lax.rsqrt(var + LN_EPS) * g_ref[...] + bln_ref[...]
        xln_ref[...] = xn.astype(jnp.bfloat16)

    y = jnp.dot(xln_ref[...], w_ref[...].astype(jnp.bfloat16),
                preferred_element_type=jnp.float32)
    y = y + b_ref[...]
    if activation == "gelu_new":
        c = math.sqrt(2.0 / math.pi)
        y = 0.5 * y * (1.0 + jnp.tanh(c * (y + 0.044715 * y * y * y)))
    o_ref[...] = y.astype(o_ref.dtype)


def ln_matmul(x, g, bln, w, b, activation=None):
    M, K = x.shape
    N = w.shape[1]
    tm, tn = _tile_m(M), _tile_n(N)
    kern = functools.partial(_ln_matmul_kernel, activation=activation)
    return pl.pallas_call(
        kern,
        grid=(M // tm, N // tn),
        in_specs=[
            pl.BlockSpec((tm, K), lambda i, j: (i, 0)),
            pl.BlockSpec((1, K), lambda i, j: (0, 0)),
            pl.BlockSpec((1, K), lambda i, j: (0, 0)),
            pl.BlockSpec((K, tn), lambda i, j: (0, j)),
            pl.BlockSpec((1, tn), lambda i, j: (0, j)),
        ],
        out_specs=pl.BlockSpec((tm, tn), lambda i, j: (i, j)),
        out_shape=jax.ShapeDtypeStruct((M, N), jnp.float32),
        scratch_shapes=[pltpu.VMEM((tm, K), jnp.bfloat16)],
        compiler_params=pltpu.CompilerParams(
            dimension_semantics=("parallel", "arbitrary"),
            vmem_limit_bytes=_VMEM_LIMIT_BYTES),
    )(x, g, bln, w, b)


# --------------- tiled matmul + bias + residual (K-accumulated) --------------
def _matmul_res_kernel(h_ref, w_ref, b_ref, r_ref, o_ref, acc_ref):
    k = pl.program_id(2)

    @pl.when(k == 0)
    def _():
        acc_ref[...] = jnp.zeros_like(acc_ref)

    acc_ref[...] += jnp.dot(h_ref[...].astype(jnp.bfloat16),
                            w_ref[...].astype(jnp.bfloat16),
                            preferred_element_type=jnp.float32)

    @pl.when(k == pl.num_programs(2) - 1)
    def _():
        o_ref[...] = (acc_ref[...] + b_ref[...] + r_ref[...]).astype(o_ref.dtype)


def matmul_bias_residual(h, w, b, residual):
    M, K = h.shape
    N = w.shape[1]
    tm, tn, tk = _tile_m(M), _tile_n(N), _tile_k(K)
    return pl.pallas_call(
        _matmul_res_kernel,
        grid=(M // tm, N // tn, K // tk),
        in_specs=[
            pl.BlockSpec((tm, tk), lambda i, j, k: (i, k)),
            pl.BlockSpec((tk, tn), lambda i, j, k: (k, j)),
            pl.BlockSpec((1, tn), lambda i, j, k: (0, j)),
            pl.BlockSpec((tm, tn), lambda i, j, k: (i, j)),
        ],
        out_specs=pl.BlockSpec((tm, tn), lambda i, j, k: (i, j)),
        out_shape=jax.ShapeDtypeStruct((M, N), jnp.float32),
        scratch_shapes=[pltpu.VMEM((tm, tn), jnp.float32)],
        compiler_params=pltpu.CompilerParams(
            dimension_semantics=("parallel", "parallel", "arbitrary"),
            vmem_limit_bytes=_VMEM_LIMIT_BYTES),
    )(h, w, b, residual)


# --------------------- flash-style causal self-attention ---------------------
def _attention_kernel(q_ref, k_ref, v_ref, o_ref, m_ref, l_ref, acc_ref,
                      *, scale, tq, tkv, n_head, head_dim):
    qi = pl.program_id(1)
    kj = pl.program_id(2)

    @pl.when(kj == 0)
    def _():
        m_ref[...] = jnp.full_like(m_ref, -1e30)
        l_ref[...] = jnp.zeros_like(l_ref)
        acc_ref[...] = jnp.zeros_like(acc_ref)

    # Causal: kv tiles strictly above the diagonal contribute nothing -> skip.
    @pl.when(kj <= qi)
    def _():
        q_all = q_ref[0]          # (tq,  H*dh) f32
        k_all = k_ref[0]          # (tkv, H*dh) f32
        v_all = v_ref[0]          # (tkv, H*dh) f32
        row = qi * tq + jax.lax.broadcasted_iota(jnp.int32, (tq, tkv), 0)
        col = kj * tkv + jax.lax.broadcasted_iota(jnp.int32, (tq, tkv), 1)
        causal = col <= row
        for h in range(n_head):
            lo = h * head_dim
            hi = lo + head_dim
            q_h = (q_all[:, lo:hi] * scale).astype(jnp.bfloat16)
            k_h = k_all[:, lo:hi].astype(jnp.bfloat16)
            v_h = v_all[:, lo:hi].astype(jnp.bfloat16)
            s = jax.lax.dot_general(                      # q @ k^T on the MXU
                q_h, k_h, (((1,), (1,)), ((), ())),
                preferred_element_type=jnp.float32)
            s = jnp.where(causal, s, -1e30)
            m_prev = m_ref[h]
            m_new = jnp.maximum(m_prev, jnp.max(s, axis=-1, keepdims=True))
            alpha = jnp.exp(m_prev - m_new)
            p = jnp.exp(s - m_new)
            l_ref[h] = alpha * l_ref[h] + jnp.sum(p, axis=-1, keepdims=True)
            acc_ref[h] = alpha * acc_ref[h] + jnp.dot(
                p.astype(jnp.bfloat16), v_h, preferred_element_type=jnp.float32)
            m_ref[h] = m_new

    @pl.when(kj == pl.num_programs(2) - 1)
    def _():
        outs = [acc_ref[h] * pl.reciprocal(l_ref[h], approx=True)
                for h in range(n_head)]
        o_ref[0] = jnp.concatenate(outs, axis=-1).astype(o_ref.dtype)


def causal_attention(q, k, v):
    B, T, D = q.shape
    tq = _pick_tile(T, (128, 64, 32, 16, 8))
    tkv = tq
    kern = functools.partial(_attention_kernel, scale=1.0 / math.sqrt(HEAD_DIM),
                             tq=tq, tkv=tkv, n_head=N_HEAD, head_dim=HEAD_DIM)
    q_spec = pl.BlockSpec((1, tq, D), lambda b, qi, kj: (b, qi, 0))
    kv_spec = pl.BlockSpec((1, tkv, D), lambda b, qi, kj: (b, kj, 0))
    return pl.pallas_call(
        kern,
        grid=(B, T // tq, T // tkv),
        in_specs=[q_spec, kv_spec, kv_spec],
        out_specs=pl.BlockSpec((1, tq, D), lambda b, qi, kj: (b, qi, 0)),
        out_shape=jax.ShapeDtypeStruct((B, T, D), jnp.float32),
        scratch_shapes=[pltpu.VMEM((N_HEAD, tq, 1), jnp.float32),
                        pltpu.VMEM((N_HEAD, tq, 1), jnp.float32),
                        pltpu.VMEM((N_HEAD, tq, HEAD_DIM), jnp.float32)],
        compiler_params=pltpu.CompilerParams(
            dimension_semantics=("parallel", "parallel", "arbitrary"),
            vmem_limit_bytes=_VMEM_LIMIT_BYTES),
    )(q, k, v)


# ---------------- fused LNf + lm_head + streaming cross-entropy --------------
def _lm_head_ce_kernel(x_ref, g_ref, bln_ref, w_ref, lab_ref,
                       logits_ref, loss_ref,
                       xln_ref, m_ref, l_ref, picked_ref, *, tv):
    j = pl.program_id(1)

    @pl.when(j == 0)
    def _():
        x = x_ref[...]
        mu = jnp.mean(x, axis=-1, keepdims=True)
        var = jnp.mean(jnp.square(x - mu), axis=-1, keepdims=True)
        xn = (x - mu) * jax.lax.rsqrt(var + LN_EPS) * g_ref[...] + bln_ref[...]
        xln_ref[...] = xn.astype(jnp.bfloat16)
        m_ref[...] = jnp.full_like(m_ref, -1e30)
        l_ref[...] = jnp.zeros_like(l_ref)
        picked_ref[...] = jnp.zeros_like(picked_ref)

    # lm_head has no bias (tie_word_embeddings=False, Linear(bias=False)).
    logits = jnp.dot(xln_ref[...], w_ref[...].astype(jnp.bfloat16),
                     preferred_element_type=jnp.float32)      # (tm, tv)
    logits_ref[...] = logits

    lab = lab_ref[...]                                        # (tm, 1) int32
    col = j * tv + jax.lax.broadcasted_iota(jnp.int32, logits.shape, 1)
    picked_ref[...] += jnp.sum(jnp.where(col == lab, logits, 0.0),
                               axis=-1, keepdims=True)

    m_prev = m_ref[...]
    m_new = jnp.maximum(m_prev, jnp.max(logits, axis=-1, keepdims=True))
    l_ref[...] = l_ref[...] * jnp.exp(m_prev - m_new) + jnp.sum(
        jnp.exp(logits - m_new), axis=-1, keepdims=True)
    m_ref[...] = m_new

    @pl.when(j == pl.num_programs(1) - 1)
    def _():
        lse = m_ref[...] + jnp.log(l_ref[...])
        valid = lab_ref[...] >= 0       # rows with label -1 contribute no loss
        loss_ref[...] = jnp.where(valid, lse - picked_ref[...], 0.0)


def lm_head_cross_entropy(x, g, bln, w, labels):
    M, D = x.shape
    V = w.shape[1]
    tm = _tile_m(M)
    tv = _pick_tile(V, (256, 128))      # vocab streamed in ~2-4 MiB-class tiles
    kern = functools.partial(_lm_head_ce_kernel, tv=tv)
    return pl.pallas_call(
        kern,
        grid=(M // tm, V // tv),
        in_specs=[
            pl.BlockSpec((tm, D), lambda i, j: (i, 0)),
            pl.BlockSpec((1, D), lambda i, j: (0, 0)),
            pl.BlockSpec((1, D), lambda i, j: (0, 0)),
            pl.BlockSpec((D, tv), lambda i, j: (0, j)),
            pl.BlockSpec((tm, 1), lambda i, j: (i, 0)),
        ],
        out_specs=(pl.BlockSpec((tm, tv), lambda i, j: (i, j)),
                   pl.BlockSpec((tm, 1), lambda i, j: (i, 0))),
        out_shape=(jax.ShapeDtypeStruct((M, V), jnp.float32),
                   jax.ShapeDtypeStruct((M, 1), jnp.float32)),
        scratch_shapes=[pltpu.VMEM((tm, D), jnp.bfloat16),
                        pltpu.VMEM((tm, 1), jnp.float32),
                        pltpu.VMEM((tm, 1), jnp.float32),
                        pltpu.VMEM((tm, 1), jnp.float32)],
        compiler_params=pltpu.CompilerParams(
            dimension_semantics=("parallel", "arbitrary"),
            vmem_limit_bytes=_VMEM_LIMIT_BYTES),
    )(x, g, bln, w, labels)


# ------------------------------ model glue -----------------------------------
def init_params(key):
    def normal(k, shape, std=0.02, dtype=jnp.float32):
        return (std * jax.random.normal(k, shape)).astype(dtype)

    bf16 = jnp.bfloat16
    keys = iter(jax.random.split(key, 3 + 4 * N_LAYER))
    params = {
        "wte": normal(next(keys), (VOCAB, D_MODEL)),
        "wpe": normal(next(keys), (N_POS, D_MODEL), std=0.01),
        "lnf_g": jnp.ones((1, D_MODEL), jnp.float32),
        "lnf_b": jnp.zeros((1, D_MODEL), jnp.float32),
        # tie_word_embeddings=False; lm_head is a bias-free Linear.
        "lm_head_w": normal(next(keys), (D_MODEL, VOCAB), dtype=bf16),
        "layers": [],
    }
    for _ in range(N_LAYER):
        params["layers"].append({
            "ln1_g": jnp.ones((1, D_MODEL), jnp.float32),
            "ln1_b": jnp.zeros((1, D_MODEL), jnp.float32),
            "attn_w": normal(next(keys), (D_MODEL, 3 * D_MODEL), dtype=bf16),
            "attn_b": jnp.zeros((1, 3 * D_MODEL), jnp.float32),
            "proj_w": normal(next(keys), (D_MODEL, D_MODEL), dtype=bf16),
            "proj_b": jnp.zeros((1, D_MODEL), jnp.float32),
            "ln2_g": jnp.ones((1, D_MODEL), jnp.float32),
            "ln2_b": jnp.zeros((1, D_MODEL), jnp.float32),
            "fc_w": normal(next(keys), (D_MODEL, 4 * D_MODEL), dtype=bf16),
            "fc_b": jnp.zeros((1, 4 * D_MODEL), jnp.float32),
            "mlp_proj_w": normal(next(keys), (4 * D_MODEL, D_MODEL), dtype=bf16),
            "mlp_proj_b": jnp.zeros((1, D_MODEL), jnp.float32),
        })
    return params


def gpt2_forward(params, idx, targets=None):
    """GPT2Wrapper.forward: returns (logits, loss)."""
    B, T = idx.shape
    D = D_MODEL
    M = B * T

    # embeddings (glue: gather on token ids + positional slice)
    x = jnp.take(params["wte"], idx, axis=0) + params["wpe"][:T][None]
    x = x.reshape(M, D).astype(jnp.float32)
    # NOTE: all dropout layers omitted (inference behaviour).

    for lyr in params["layers"]:
        # ---- attention block (pre-LN); LN1 fused into the QKV matmul ----
        qkv = ln_matmul(x, lyr["ln1_g"], lyr["ln1_b"],
                        lyr["attn_w"], lyr["attn_b"])            # (M, 3D)
        qkv = qkv.reshape(B, T, 3 * D)
        q, k, v = qkv[..., :D], qkv[..., D:2 * D], qkv[..., 2 * D:]
        a = causal_attention(q, k, v).reshape(M, D)
        # output projection with fused bias + residual add
        x = matmul_bias_residual(a, lyr["proj_w"], lyr["proj_b"], x)

        # ---- MLP block (pre-LN); LN2 + fc + gelu fused, proj + residual fused
        h = ln_matmul(x, lyr["ln2_g"], lyr["ln2_b"],
                      lyr["fc_w"], lyr["fc_b"], activation="gelu_new")
        x = matmul_bias_residual(h, lyr["mlp_proj_w"], lyr["mlp_proj_b"], x)

    # HF shift: logits[:, :-1] vs labels[:, 1:]; the final position of each
    # sequence gets sentinel label -1 and contributes zero loss.
    if targets is not None:
        shifted = jnp.concatenate(
            [targets[:, 1:], jnp.full((B, 1), -1, targets.dtype)], axis=1)
        labels = shifted.reshape(M, 1).astype(jnp.int32)
    else:
        labels = jnp.full((M, 1), -1, jnp.int32)

    logits_flat, per_row = lm_head_cross_entropy(
        x, params["lnf_g"], params["lnf_b"], params["lm_head_w"], labels)
    logits = logits_flat.reshape(B, T, VOCAB)

    loss = None
    if targets is not None:
        # TODO(synk): ignore_index=-100 divisor semantics of nn.CrossEntropyLoss
        # not implemented (mean is over all B*(T-1) shifted positions).
        loss = jnp.sum(per_row) / (B * (T - 1))
    return logits, loss


# --------------------- pure-JAX reference (sanity check) ---------------------
def gpt2_reference(params, idx, targets):
    B, T = idx.shape
    D, H, dh = D_MODEL, N_HEAD, HEAD_DIM

    def ln(x, g, b):
        mu = jnp.mean(x, -1, keepdims=True)
        var = jnp.mean(jnp.square(x - mu), -1, keepdims=True)
        return (x - mu) * jax.lax.rsqrt(var + LN_EPS) * g + b

    def gelu_new(y):
        c = math.sqrt(2.0 / math.pi)
        return 0.5 * y * (1.0 + jnp.tanh(c * (y + 0.044715 * y ** 3)))

    f32 = jnp.float32
    x = jnp.take(params["wte"], idx, axis=0) + params["wpe"][:T][None]
    for lyr in params["layers"]:
        h = ln(x, lyr["ln1_g"][0], lyr["ln1_b"][0])
        qkv = h @ lyr["attn_w"].astype(f32) + lyr["attn_b"][0]
        q, k, v = jnp.split(qkv, 3, axis=-1)
        q = q.reshape(B, T, H, dh).transpose(0, 2, 1, 3)
        k = k.reshape(B, T, H, dh).transpose(0, 2, 1, 3)
        v = v.reshape(B, T, H, dh).transpose(0, 2, 1, 3)
        s = (q @ jnp.swapaxes(k, -1, -2)) / math.sqrt(dh)
        s = jnp.where(jnp.tril(jnp.ones((T, T), bool)), s, -1e30)
        p = jax.nn.softmax(s, axis=-1)
        a = (p @ v).transpose(0, 2, 1, 3).reshape(B, T, D)
        x = x + a @ lyr["proj_w"].astype(f32) + lyr["proj_b"][0]
        h = ln(x, lyr["ln2_g"][0], lyr["ln2_b"][0])
        h = gelu_new(h @ lyr["fc_w"].astype(f32) + lyr["fc_b"][0])
        x = x + h @ lyr["mlp_proj_w"].astype(f32) + lyr["mlp_proj_b"][0]
    h = ln(x, params["lnf_g"][0], params["lnf_b"][0])
    logits = h @ params["lm_head_w"].astype(f32)
    sl = logits[:, :-1].reshape(-1, VOCAB)
    st = targets[:, 1:].reshape(-1)
    m = jnp.max(sl, axis=-1, keepdims=True)
    lse = (m + jnp.log(jnp.sum(jnp.exp(sl - m), axis=-1, keepdims=True)))[:, 0]
    picked = jnp.take_along_axis(sl, st[:, None], axis=-1)[:, 0]
    return logits, jnp.mean(lse - picked)


if __name__ == "__main__":
    B, T = 2, 96
    key = jax.random.PRNGKey(0)
    pkey, ikey, tkey = jax.random.split(key, 3)

    params = init_params(pkey)
    idx = jax.random.randint(ikey, (B, T), 0, VOCAB, dtype=jnp.int32)
    targets = jax.random.randint(tkey, (B, T), 0, VOCAB, dtype=jnp.int32)

    logits, loss = gpt2_forward(params, idx, targets)
    jax.block_until_ready((logits, loss))

    assert logits.shape == (B, T, VOCAB)
    assert logits.dtype == jnp.float32
    assert loss.shape == ()
    assert bool(jnp.isfinite(loss))

    # numerical sanity vs pure-JAX reference (generous bf16-MXU tolerances)
    ref_logits, ref_loss = gpt2_reference(params, idx, targets)
    assert float(jnp.max(jnp.abs(logits - ref_logits))) < 0.2
    assert abs(float(loss) - float(ref_loss)) < 0.1
    # streaming-CE path checked tightly against the kernel's own logits
    sl = logits[:, :-1].reshape(-1, VOCAB)
    st = targets[:, 1:].reshape(-1)
    m = jnp.max(sl, axis=-1, keepdims=True)
    lse = (m + jnp.log(jnp.sum(jnp.exp(sl - m), axis=-1, keepdims=True)))[:, 0]
    picked = jnp.take_along_axis(sl, st[:, None], axis=-1)[:, 0]
    assert abs(float(loss) - float(jnp.mean(lse - picked))) < 5e-3

    print("KERNEL_OK")
</pallas_src>

<mosaic_0001>
module attributes {stable_mosaic.version = 11 : i64} {
  func.func @_ln_matmul_kernel(%arg0: i32, %arg1: i32, %arg2: memref<64x128xf32, #tpu.memory_space<vmem>>, %arg3: memref<1x128xf32, #tpu.memory_space<vmem>>, %arg4: memref<1x128xf32, #tpu.memory_space<vmem>>, %arg5: memref<128x128xbf16, #tpu.memory_space<vmem>>, %arg6: memref<1x128xf32, #tpu.memory_space<vmem>>, %arg7: memref<64x128xf32, #tpu.memory_space<vmem>>, %arg8: memref<64x128xbf16, #tpu.memory_space<vmem>>) attributes {dimension_semantics = [#tpu.dimension_semantics<parallel>, #tpu.dimension_semantics<arbitrary>], iteration_bounds = array<i64: 3, 3>, scalar_prefetch = 0 : i64, scratch_operands = 1 : i64, tpu.core_type = #tpu.core_type<tc>, window_params = [{transform_indices = @transform_0, window_bounds = array<i64: 64, 128>}, {pipeline_mode = #tpu.pipeline_mode<synchronous>, transform_indices = @transform_1, window_bounds = array<i64: 1, 128>}, {pipeline_mode = #tpu.pipeline_mode<synchronous>, transform_indices = @transform_2, window_bounds = array<i64: 1, 128>}, {transform_indices = @transform_3, window_bounds = array<i64: 128, 128>}, {transform_indices = @transform_4, window_bounds = array<i64: 1, 128>}, {transform_indices = @transform_5, window_bounds = array<i64: 64, 128>}]} {
    %c0_i32 = arith.constant 0 : i32
    %0 = arith.cmpi eq, %arg1, %c0_i32 : i32
    %1 = arith.extui %0 : i1 to i32
    %c0_i32_0 = arith.constant 0 : i32
    %2 = arith.cmpi ne, %1, %c0_i32_0 : i32
    scf.if %2 {
      %c0_8 = arith.constant 0 : index
      %c0_9 = arith.constant 0 : index
      %10 = vector.load %arg2[%c0_8, %c0_9] : memref<64x128xf32, #tpu.memory_space<vmem>>, vector<64x128xf32>
      %cst_10 = arith.constant dense<0.000000e+00> : vector<64xf32>
      %11 = vector.multi_reduction <add>, %10, %cst_10 [1] : vector<64x128xf32> to vector<64xf32>
      %12 = vector.shape_cast %11 : vector<64xf32> to vector<64x1xf32>
      %cst_11 = arith.constant 1.280000e+02 : f32
      %13 = vector.broadcast %cst_11 : f32 to vector<64x1xf32>
      %14 = arith.divf %12, %13 : vector<64x1xf32>
      %15 = vector.broadcast %14 : vector<64x1xf32> to vector<64x128xf32>
      %16 = arith.subf %10, %15 : vector<64x128xf32>
      %17 = arith.mulf %16, %16 : vector<64x128xf32>
      %cst_12 = arith.constant dense<0.000000e+00> : vector<64xf32>
      %18 = vector.multi_reduction <add>, %17, %cst_12 [1] : vector<64x128xf32> to vector<64xf32>
      %19 = vector.shape_cast %18 : vector<64xf32> to vector<64x1xf32>
      %cst_13 = arith.constant 1.280000e+02 : f32
      %20 = vector.broadcast %cst_13 : f32 to vector<64x1xf32>
      %21 = arith.divf %19, %20 : vector<64x1xf32>
      %22 = vector.broadcast %14 : vector<64x1xf32> to vector<64x128xf32>
      %23 = arith.subf %10, %22 : vector<64x128xf32>
      %cst_14 = arith.constant 9.99999974E-6 : f32
      %24 = vector.broadcast %cst_14 : f32 to vector<64x1xf32>
      %25 = arith.addf %21, %24 : vector<64x1xf32>
      %26 = math.rsqrt %25 : vector<64x1xf32>
      %27 = vector.broadcast %26 : vector<64x1xf32> to vector<64x128xf32>
      %28 = arith.mulf %23, %27 : vector<64x128xf32>
      %c0_15 = arith.constant 0 : index
      %c0_16 = arith.constant 0 : index
      %29 = vector.load %arg3[%c0_15, %c0_16] : memref<1x128xf32, #tpu.memory_space<vmem>>, vector<1x128xf32>
      %30 = vector.broadcast %29 : vector<1x128xf32> to vector<64x128xf32>
      %31 = arith.mulf %28, %30 : vector<64x128xf32>
      %c0_17 = arith.constant 0 : index
      %c0_18 = arith.constant 0 : index
      %32 = vector.load %arg4[%c0_17, %c0_18] : memref<1x128xf32, #tpu.memory_space<vmem>>, vector<1x128xf32>
      %33 = vector.broadcast %32 : vector<1x128xf32> to vector<64x128xf32>
      %34 = arith.addf %31, %33 : vector<64x128xf32>
      %35 = arith.truncf %34 : vector<64x128xf32> to vector<64x128xbf16>
      %c0_19 = arith.constant 0 : index
      %c0_20 = arith.constant 0 : index
      %36 = vector.load %arg8[%c0_19, %c0_20] : memref<64x128xbf16, #tpu.memory_space<vmem>>, vector<64x128xbf16>
      tpu.vector_store %arg8[%c0_19, %c0_20], %35 {strides = array<i32>} : memref<64x128xbf16, #tpu.memory_space<vmem>>, vector<64x128xbf16>,
    } else {
    }
    %c0 = arith.constant 0 : index
    %c0_1 = arith.constant 0 : index
    %3 = vector.load %arg8[%c0, %c0_1] : memref<64x128xbf16, #tpu.memory_space<vmem>>, vector<64x128xbf16>
    %c0_2 = arith.constant 0 : index
    %c0_3 = arith.constant 0 : index
    %4 = vector.load %arg5[%c0_2, %c0_3] : memref<128x128xbf16, #tpu.memory_space<vmem>>, vector<128x128xbf16>
    %cst = arith.constant dense<0.000000e+00> : vector<64x128xf32>
    %5 = tpu.matmul %3, %4, %cst {dimension_numbers = #tpu.dot_dimension_numbers<[1], [0], [0], [1], [0, 0, 1, 1], [], []>} : vector<64x128xbf16>, vector<128x128xbf16>, vector<64x128xf32> -> vector<64x128xf32>
    %c0_4 = arith.constant 0 : index
    %c0_5 = arith.constant 0 : index
    %6 = vector.load %arg6[%c0_4, %c0_5] : memref<1x128xf32, #tpu.memory_space<vmem>>, vector<1x128xf32>
    %7 = vector.broadcast %6 : vector<1x128xf32> to vector<64x128xf32>
    %8 = arith.addf %5, %7 : vector<64x128xf32>
    %c0_6 = arith.constant 0 : index
    %c0_7 = arith.constant 0 : index
    %9 = vector.load %arg7[%c0_6, %c0_7] : memref<64x128xf32, #tpu.memory_space<vmem>>, vector<64x128xf32>
    tpu.vector_store %arg7[%c0_6, %c0_7], %8 {strides = array<i32>} : memref<64x128xf32, #tpu.memory_space<vmem>>, vector<64x128xf32>,
    return
  }
  func.func @transform_0(%arg0: i32, %arg1: i32) -> (i32, i32) {
    %c0_i32 = arith.constant 0 : i32
    %c0_i32_0 = arith.constant 0 : i32
    return %arg0, %c0_i32 : i32, i32
  }
  func.func @transform_1(%arg0: i32, %arg1: i32) -> (i32, i32) {
    %c0_i32 = arith.constant 0 : i32
    %c0_i32_0 = arith.constant 0 : i32
    %c0_i32_1 = arith.constant 0 : i32
    return %c0_i32, %c0_i32_0 : i32, i32
  }
  func.func @transform_2(%arg0: i32, %arg1: i32) -> (i32, i32) {
    %c0_i32 = arith.constant 0 : i32
    %c0_i32_0 = arith.constant 0 : i32
    %c0_i32_1 = arith.constant 0 : i32
    return %c0_i32, %c0_i32_0 : i32, i32
  }
  func.func @transform_3(%arg0: i32, %arg1: i32) -> (i32, i32) {
    %c0_i32 = arith.constant 0 : i32
    %c0_i32_0 = arith.constant 0 : i32
    return %c0_i32, %arg1 : i32, i32
  }
  func.func @transform_4(%arg0: i32, %arg1: i32) -> (i32, i32) {
    %c0_i32 = arith.constant 0 : i32
    %c0_i32_0 = arith.constant 0 : i32
    return %c0_i32, %arg1 : i32, i32
  }
  func.func @transform_5(%arg0: i32, %arg1: i32) -> (i32, i32) {
    %c0_i32 = arith.constant 0 : i32
    return %arg0, %arg1 : i32, i32
  }
}

</mosaic_0001>

<llo_original>
// kernel: tpu_custom_call.1
$region0: #{tpu_custom_call.1}
  #allocation0 [shape = 'u32[]', space=smem, size = 0x4, offset = 0x4, fixed_abs, tag = 'smem constant byte address 0x4 - core index']
  #allocation1 [shape = 'u32[144,128]{1,0:T(1,128)}', space=vmem, size = 0x12000, scoped, tag = 'internal scratch']
  #allocation2 [shape = 'bf16[64,128]{1,0:T(16,128)(2,1)}', space=vmem, size = 0x4000, scoped, tag = 'scratch operand']
  %s0 = inlined_call_operand.hbm [shape: f32[192,128], index: 0, kind: input, shape index: {}]
  %s1 = inlined_call_operand.vmem [shape: f32[1,128], index: 1, kind: input, shape index: {}]
  %s2 = inlined_call_operand.vmem [shape: f32[1,128], index: 2, kind: input, shape index: {}]
  %s3 = inlined_call_operand.hbm [shape: bf16[128,384], index: 3, kind: input, shape index: {}]
  %s4 = inlined_call_operand.vmem [shape: f32[1,384], index: 4, kind: input, shape index: {}]
  %s5 = inlined_call_operand.hbm [shape: f32[192,384], index: 5, kind: output, shape index: {}]
  %s6 = sld [smem:[#allocation0]]
  $region65: #{tpu_custom_call.1} parent=0
    _
  %s8 = ssub.s32 1, %s6
  %s9 = scalar_select 0, %s8, %s6
  $region1: #{tpu_custom_call.1} parent=0
    #allocation3 [shape = 'u8[65536]{0}', space=vmem, size = 0x10000, scoped, tag = 'input window, operand 0']
    #allocation4 [shape = 's32[2]{0}', space=sflag, size = 0x8, scoped, tag = 'scoped memory for tpu_custom_call.1']
    #allocation5 [shape = 's32[2]{0}', space=sflag, size = 0x8, scoped, tag = 'scoped memory for tpu_custom_call.1']
    #allocation6 [shape = 'u8[65536]{0}', space=vmem, size = 0x10000, scoped, tag = 'input window, operand 3']
    #allocation7 [shape = 's32[2]{0}', space=sflag, size = 0x8, scoped, tag = 'scoped memory for tpu_custom_call.1']
    #allocation8 [shape = 'u8[65536]{0}', space=vmem, size = 0x10000, scoped, tag = 'output window, operand 0']
    %10 = vsyncpa [#allocation4], 0
    %s11 = scalar_lea.sflag [#allocation4], 1
    %12 = vsyncpa %s11, 0
    %13 = vsyncpa [#allocation7], 0
    %s14 = scalar_lea.sflag [#allocation7], 1
    %15 = vsyncpa %s14, 0
    %16 = vsyncpa [#allocation5], 0
    %s17 = scalar_lea.sflag [#allocation5], 1
    %18 = vsyncpa %s17, 0
    loop: start=0, step=1, limit=11
    $region2: #{tpu_custom_call.1} parent=1 // loop_pre_header
      _
    $region3: #{tpu_custom_call.1} parent=1 // loop_header
      %s20 = sphi 0, %s24
      %p21 = scmp.ge.s32.totalorder %s20, 11
      %s27 = sphi 0, %s39
      %s28 = sphi 0, %s35
      %s29 = sphi 0, %s27
      %s30 = sphi 0, %s28
      %s31 = sphi 0, %s29
      %s32 = sphi 0, %s30
      %s42 = sphi 0, %s44
      %s45 = sphi 0, %s42
      %s46 = sphi 0, %s45
      %s62 = sphi 0, %s46
      %s66 = sphi 0, %s66
      %s68 = sphi 0, %s66
      %s69 = sphi 0, %s68
      %s83 = sphi 0, %s69
      %s87 = sphi 0, %s87
      %s89 = sphi 0, %s87
      %s90 = sphi 0, %s89
      %s104 = sphi 0, %s90
      %s110 = sphi 0, %s112
      %s113 = sphi 0, %s110
      %s114 = sphi 0, %s113
      %s130 = sphi 0, %s114
      %s136 = sphi 0, %s138
      %s139 = sphi 0, %s136
      %s140 = sphi 0, %s139
      %s156 = sphi 0, %s140
      %s164 = sphi 0, %s166
      %s167 = sphi 0, %s164
      %s168 = sphi 0, %s167
      %s184 = sphi 0, %s168
    $region4: #{tpu_custom_call.1} parent=1 // loop_header_branch
      %23 = sbr.rel (%p21) target = $region8
    $region5: #{tpu_custom_call.1} parent=1 // loop_body
      %s25 = ssub.s32 %s20, 1
      %s26 = ssub.s32 %s20, 2
      %s33 = sadd.s32 1, %s28
      %p34 = scmp.ge.s32.totalorder %s33, 3
      %s35 = scalar_select %p34, 0, %s33
      %s36 = sadd.s32 1, %s27
      %s37 = scalar_select %p34, %s36, %s27
      %p38 = scmp.ge.s32.totalorder %s37, 3
      %s39 = scalar_select %p38, 0, %s37
      %s40 = ssub.s32 %s27, %s39
      %p41 = scmp.eq.s32.totalorder %s40, 0
      %s43 = sadd.s32 %s42, 1
      %s44 = scalar_select %p41, %s42, %s43
      %p47 = pneg %p41
      %p48 = scmp.eq.s32.totalorder %s20, 8
      %p49 = por %p47, %p48
      %p50 = scmp.ne.s32.totalorder %s42, %s45
      %p51 = scmp.eq.s32.totalorder %s20, 0
      %p52 = por %p50, %p51
      %p53 = scmp.ne.s32.totalorder %s42, %s45
      %p54 = scmp.eq.s32.totalorder %s25, 8
      %p55 = por %p53, %p54
      %p56 = scmp.ne.s32.totalorder %s45, %s46
      %p57 = scmp.eq.s32.totalorder %s25, 0
      %p58 = por %p56, %p57
      %p59 = scmp.ne.s32.totalorder %s45, %s46
      %p60 = scmp.eq.s32.totalorder %s26, 8
      %p61 = por %p59, %p60
      %p63 = scmp.ne.s32.totalorder %s46, %s62
      %p64 = scmp.eq.s32.totalorder %s26, 0
      %p65 = por %p63, %p64
      %s67 = sadd.s32 %s66, 1
      %p70 = scmp.eq.s32.totalorder %s20, 8
      %p71 = scmp.ne.s32.totalorder %s66, %s68
      %p72 = scmp.eq.s32.totalorder %s20, 0
      %p73 = por %p71, %p72
      %p74 = scmp.ne.s32.totalorder %s66, %s68
      %p75 = scmp.eq.s32.totalorder %s25, 8
      %p76 = por %p74, %p75
      %p77 = scmp.ne.s32.totalorder %s68, %s69
      %p78 = scmp.eq.s32.totalorder %s25, 0
      %p79 = por %p77, %p78
      %p80 = scmp.ne.s32.totalorder %s68, %s69
      %p81 = scmp.eq.s32.totalorder %s26, 8
      %p82 = por %p80, %p81
      %p84 = scmp.ne.s32.totalorder %s69, %s83
      %p85 = scmp.eq.s32.totalorder %s26, 0
      %p86 = por %p84, %p85
      %s88 = sadd.s32 %s87, 1
      %p91 = scmp.eq.s32.totalorder %s20, 8
      %p92 = scmp.ne.s32.totalorder %s87, %s89
      %p93 = scmp.eq.s32.totalorder %s20, 0
      %p94 = por %p92, %p93
      %p95 = scmp.ne.s32.totalorder %s87, %s89
      %p96 = scmp.eq.s32.totalorder %s25, 8
      %p97 = por %p95, %p96
      %p98 = scmp.ne.s32.totalorder %s89, %s90
      %p99 = scmp.eq.s32.totalorder %s25, 0
      %p100 = por %p98, %p99
      %p101 = scmp.ne.s32.totalorder %s89, %s90
      %p102 = scmp.eq.s32.totalorder %s26, 8
      %p103 = por %p101, %p102
      %p105 = scmp.ne.s32.totalorder %s90, %s104
      %p106 = scmp.eq.s32.totalorder %s26, 0
      %p107 = por %p105, %p106
      %s108 = ssub.s32 %s28, %s35
      %p109 = scmp.eq.s32.totalorder %s108, 0
      %s111 = sadd.s32 %s110, 1
      %s112 = scalar_select %p109, %s110, %s111
      %p115 = pneg %p109
      %p116 = scmp.eq.s32.totalorder %s20, 8
      %p117 = por %p115, %p116
      %p118 = scmp.ne.s32.totalorder %s110, %s113
      %p119 = scmp.eq.s32.totalorder %s20, 0
      %p120 = por %p118, %p119
      %p121 = scmp.ne.s32.totalorder %s110, %s113
      %p122 = scmp.eq.s32.totalorder %s25, 8
      %p123 = por %p121, %p122
      %p124 = scmp.ne.s32.totalorder %s113, %s114
      %p125 = scmp.eq.s32.totalorder %s25, 0
      %p126 = por %p124, %p125
      %p127 = scmp.ne.s32.totalorder %s113, %s114
      %p128 = scmp.eq.s32.totalorder %s26, 8
      %p129 = por %p127, %p128
      %p131 = scmp.ne.s32.totalorder %s114, %s130
      %p132 = scmp.eq.s32.totalorder %s26, 0
      %p133 = por %p131, %p132
      %s134 = ssub.s32 %s28, %s35
      %p135 = scmp.eq.s32.totalorder %s134, 0
      %s137 = sadd.s32 %s136, 1
      %s138 = scalar_select %p135, %s136, %s137
      %p141 = pneg %p135
      %p142 = scmp.eq.s32.totalorder %s20, 8
      %p143 = por %p141, %p142
      %p144 = scmp.ne.s32.totalorder %s136, %s139
      %p145 = scmp.eq.s32.totalorder %s20, 0
      %p146 = por %p144, %p145
      %p147 = scmp.ne.s32.totalorder %s136, %s139
      %p148 = scmp.eq.s32.totalorder %s25, 8
      %p149 = por %p147, %p148
      %p150 = scmp.ne.s32.totalorder %s139, %s140
      %p151 = scmp.eq.s32.totalorder %s25, 0
      %p152 = por %p150, %p151
      %p153 = scmp.ne.s32.totalorder %s139, %s140
      %p154 = scmp.eq.s32.totalorder %s26, 8
      %p155 = por %p153, %p154
      %p157 = scmp.ne.s32.totalorder %s140, %s156
      %p158 = scmp.eq.s32.totalorder %s26, 0
      %p159 = por %p157, %p158
      %s160 = ssub.s32 %s27, %s39
      %s161 = ssub.s32 %s28, %s35
      %s162 = sor.u32 %s160, %s161
      %p163 = scmp.eq.s32.totalorder %s162, 0
      %s165 = sadd.s32 %s164, 1
      %s166 = scalar_select %p163, %s164, %s165
      %p169 = pneg %p163
      %p170 = scmp.eq.s32.totalorder %s20, 8
      %p171 = por %p169, %p170
      %p172 = scmp.ne.s32.totalorder %s164, %s167
      %p173 = scmp.eq.s32.totalorder %s20, 0
      %p174 = por %p172, %p173
      %p175 = scmp.ne.s32.totalorder %s164, %s167
      %p176 = scmp.eq.s32.totalorder %s25, 8
      %p177 = por %p175, %p176
      %p178 = scmp.ne.s32.totalorder %s167, %s168
      %p179 = scmp.eq.s32.totalorder %s25, 0
      %p180 = por %p178, %p179
      %p181 = scmp.ne.s32.totalorder %s167, %s168
      %p182 = scmp.eq.s32.totalorder %s26, 8
      %p183 = por %p181, %p182
      %p185 = scmp.ne.s32.totalorder %s168, %s184
      %p186 = scmp.eq.s32.totalorder %s26, 0
      %p187 = por %p185, %p186
      %p188 = scmp.le.s32.totalorder 1, %s20
      %p189 = scmp.lt.s32.totalorder %s20, 10
      %p190 = pnand %p188, %p189
      %p191 = pneg %p190
      // Predicated region
      $region9: #{tpu_custom_call.1} parent=5 // pred_check
        _
      $region10: #{tpu_custom_call.1} parent=5 // pred_check_branch
        %193 = sbr.rel (%p190) target = $region12
      $region11: #{tpu_custom_call.1} parent=5 // pred_region
        %s194 = ssub.s32 %s20, 1
        // Predicated region
        $region13: #{tpu_custom_call.1} parent=11 // pred_check
          %p195 = pneg %p79
        $region14: #{tpu_custom_call.1} parent=11 // pred_check_branch
          %197 = sbr.rel (%p195) target = $region16
        $region15: #{tpu_custom_call.1} parent=11 // pred_region
          _
        $region16: #{tpu_custom_call.1} parent=11 // pred_fallthru
          _
        // Predicated region
        $region17: #{tpu_custom_call.1} parent=11 // pred_check
          %p198 = pneg %p100
        $region18: #{tpu_custom_call.1} parent=11 // pred_check_branch
          %200 = sbr.rel (%p198) target = $region20
        $region19: #{tpu_custom_call.1} parent=11 // pred_region
          _
        $region20: #{tpu_custom_call.1} parent=11 // pred_fallthru
          _
      $region12: #{tpu_custom_call.1} parent=5 // pred_fallthru
        _
      %p201 = scmp.lt.s32.totalorder %s20, 9
      // Predicated region
      $region21: #{tpu_custom_call.1} parent=5 // pred_check
        %p202 = pneg %p201
      $region22: #{tpu_custom_call.1} parent=5 // pred_check_branch
        %204 = sbr.rel (%p202) target = $region24
      $region23: #{tpu_custom_call.1} parent=5 // pred_region
        // Predicated region
        $region25: #{tpu_custom_call.1} parent=23 // pred_check
          %p205 = pneg %p52
        $region26: #{tpu_custom_call.1} parent=23 // pred_check_branch
          %207 = sbr.rel (%p205) target = $region28
        $region27: #{tpu_custom_call.1} parent=23 // pred_region
          %s208 = sand.u32 %s42, 1
          %s209 = scalar_lea.sflag [#allocation4], %s208
          %s210 = sand.u32 %s42, 1
          %s211 = smul.addr %s210, 64
          %s212 = scalar_lea.vmem [#allocation3], %s211
          %s213 = smul.u32 8, %s27
          %s215 = ssub.s32 1024, 1024
          %216 = vsyncadd %s209, %s215
          %s217 = smul.addr %s213, 128
          %s218 = scalar_lea.hbm %s0, %s217
          %s219 = sshll.u32 %s212, 4
          %s220 = int_to_ptr.vmem [resolvable:$true] %s219
          %225 = dma.hbm_to_vmem [thread:$0]  %s218, 1024, %s220, %s209, 128, 128, 8
        $region28: #{tpu_custom_call.1} parent=23 // pred_fallthru
          _
        // Predicated region
        $region29: #{tpu_custom_call.1} parent=23 // pred_check
          %p226 = pneg %p120
        $region30: #{tpu_custom_call.1} parent=23 // pred_check_branch
          %228 = sbr.rel (%p226) target = $region32
        $region31: #{tpu_custom_call.1} parent=23 // pred_region
          %s229 = sand.u32 %s110, 1
          %s230 = scalar_lea.sflag [#allocation7], %s229
          %s231 = sand.u32 %s110, 1
          %s232 = smul.addr %s231, 64
          %s233 = scalar_lea.vmem [#allocation6], %s232
          %s235 = ssub.s32 1024, 1024
          %236 = vsyncadd %s230, %s235
          %s237 = smul.addr %s28, 64
          %s238 = scalar_lea.hbm %s3, %s237
          %s239 = sshll.u32 %s233, 4
          %s240 = int_to_ptr.vmem [resolvable:$true] %s239
          %245 = dma.hbm_to_vmem [thread:$0]  %s238, 1024, %s240, %s230, 192, 64, 4
        $region32: #{tpu_custom_call.1} parent=23 // pred_fallthru
          _
        // Predicated region
        $region33: #{tpu_custom_call.1} parent=23 // pred_check
          %p246 = pneg %p146
        $region34: #{tpu_custom_call.1} parent=23 // pred_check_branch
          %248 = sbr.rel (%p246) target = $region36
        $region35: #{tpu_custom_call.1} parent=23 // pred_region
          %p249 = scmp.lt.s32.totalorder %s28, 2
          %s250 = scalar_select %p249, %s28, 2
          %s251 = scalar_lea.vmem %s4, %s250
        $region36: #{tpu_custom_call.1} parent=23 // pred_fallthru
          _
      $region24: #{tpu_custom_call.1} parent=5 // pred_fallthru
        _
      %p252 = scmp.le.s32.totalorder 1, %s20
      %p253 = scmp.lt.s32.totalorder %s20, 10
      %p254 = pnand %p252, %p253
      %p255 = pneg %p254
      // Predicated region
      $region37: #{tpu_custom_call.1} parent=5 // pred_check
        _
      $region38: #{tpu_custom_call.1} parent=5 // pred_check_branch
        %257 = sbr.rel (%p254) target = $region40
      $region39: #{tpu_custom_call.1} parent=5 // pred_region
        %s258 = ssub.s32 %s20, 1
        %s259 = sand.u32 %s45, 1
        %s260 = scalar_lea.sflag [#allocation4], %s259
        %s261 = sand.u32 %s45, 1
        %s262 = smul.addr %s261, 64
        %s263 = scalar_lea.vmem [#allocation3], %s262
        // Predicated region
        $region41: #{tpu_custom_call.1} parent=39 // pred_check
          %p264 = pneg %p58
        $region42: #{tpu_custom_call.1} parent=39 // pred_check_branch
          %266 = sbr.rel (%p264) target = $region44
        $region43: #{tpu_custom_call.1} parent=39 // pred_region
          %267 = dma.done %s260, 1024
        $region44: #{tpu_custom_call.1} parent=39 // pred_fallthru
          _
        %s268 = sand.u32 %s113, 1
        %s269 = scalar_lea.sflag [#allocation7], %s268
        %s270 = sand.u32 %s113, 1
        %s271 = smul.addr %s270, 64
        %s272 = scalar_lea.vmem [#allocation6], %s271
        // Predicated region
        $region45: #{tpu_custom_call.1} parent=39 // pred_check
          %p273 = pneg %p126
        $region46: #{tpu_custom_call.1} parent=39 // pred_check_branch
          %275 = sbr.rel (%p273) target = $region48
        $region47: #{tpu_custom_call.1} parent=39 // pred_region
          %276 = dma.done %s269, 1024
        $region48: #{tpu_custom_call.1} parent=39 // pred_fallthru
          _
        %s277 = sand.u32 %s45, 1
        %s278 = scalar_lea.sflag [#allocation4], %s277
        %s279 = sand.u32 %s45, 1
        %s280 = smul.addr %s279, 64
        %s281 = scalar_lea.vmem [#allocation3], %s280
        %p282 = pneg %p58
        %p283 = pneg %p55
        %p284 = pneg %p79
        %p285 = pneg %p76
        %p286 = pneg %p100
        %p287 = pneg %p97
        %s288 = sand.u32 %s113, 1
        %s289 = scalar_lea.sflag [#allocation7], %s288
        %s290 = sand.u32 %s113, 1
        %s291 = smul.addr %s290, 64
        %s292 = scalar_lea.vmem [#allocation6], %s291
        %p293 = pneg %p126
        %p294 = pneg %p123
        %p295 = scmp.lt.s32.totalorder %s30, 2
        %s296 = scalar_select %p295, %s30, 2
        %s297 = scalar_lea.vmem %s4, %s296
        %p298 = pneg %p152
        %p299 = pneg %p149
        %p300 = pneg %p180
        %p301 = pneg %p177
        %s302 = sand.u32 %s167, 1
        %s303 = scalar_lea.sflag [#allocation5], %s302
        %s304 = sand.u32 %s167, 1
        %s305 = smul.addr %s304, 64
        %s306 = scalar_lea.vmem [#allocation8], %s305
        %s307 = smul.u32 8, %s29
        %p308 = scmp.lt.s32.totalorder %s30, 2
        %s309 = scalar_select %p308, %s30, 2
        %s310 = scalar_lea.vmem %s4, %s309
        %s311 = smul.u32 8, %s29
        %p313 = scmp.eq.s32.totalorder %s30, 0
        // Predicated region
        $region49: #{tpu_custom_call.1} parent=39 // pred_check
          %p314 = pneg %p313
        $region50: #{tpu_custom_call.1} parent=39 // pred_check_branch
          %316 = sbr.rel (%p314) target = $region52
        $region51: #{tpu_custom_call.1} parent=39 // pred_region
          %v317 = vld [vmem:[%s263] sm:$0xff]
          %v318 = vld [vmem:[%s263 + $0x8] sm:$0xff]
          %v319 = vld [vmem:[%s263 + $0x10] sm:$0xff]
          %v320 = vld [vmem:[%s263 + $0x18] sm:$0xff]
          %v321 = vld [vmem:[%s263 + $0x20] sm:$0xff]
          %v322 = vld [vmem:[%s263 + $0x28] sm:$0xff]
          %v323 = vld [vmem:[%s263 + $0x30] sm:$0xff]
          %v324 = vld [vmem:[%s263 + $0x38] sm:$0xff]
          %325 = vadd.xlane.f32.xlu0 %v317
          %v326 = vpop.xlane.xlu0 %325
          %327 = vadd.xlane.f32.xlu0 %v318
          %v328 = vpop.xlane.xlu0 %327
          %329 = vadd.xlane.f32.xlu0 %v319
          %v330 = vpop.xlane.xlu0 %329
          %331 = vadd.xlane.f32.xlu0 %v320
          %v332 = vpop.xlane.xlu0 %331
          %333 = vadd.xlane.f32.xlu0 %v321
          %v334 = vpop.xlane.xlu0 %333
          %335 = vadd.xlane.f32.xlu0 %v322
          %v336 = vpop.xlane.xlu0 %335
          %337 = vadd.xlane.f32.xlu0 %v323
          %v338 = vpop.xlane.xlu0 %337
          %339 = vadd.xlane.f32.xlu0 %v324
          %v340 = vpop.xlane.xlu0 %339
          %v341 = vrcp.pop 128.0
          %v342 = vmul.f32 %v326, %v341
          %v343 = vmul.f32 %v328, %v341
          %v344 = vmul.f32 %v330, %v341
          %v345 = vmul.f32 %v332, %v341
          %v346 = vmul.f32 %v334, %v341
          %v347 = vmul.f32 %v336, %v341
          %v348 = vmul.f32 %v338, %v341
          %v349 = vmul.f32 %v340, %v341
          %v350 = vsub.f32 %v317, %v342
          %v351 = vsub.f32 %v318, %v343
          %v352 = vsub.f32 %v319, %v344
          %v353 = vsub.f32 %v320, %v345
          %v354 = vsub.f32 %v321, %v346
          %v355 = vsub.f32 %v322, %v347
          %v356 = vsub.f32 %v323, %v348
          %v357 = vsub.f32 %v324, %v349
          %v358 = vmul.f32 %v350, %v350
          %v359 = vmul.f32 %v351, %v351
          %v360 = vmul.f32 %v352, %v352
          %v361 = vmul.f32 %v353, %v353
          %v362 = vmul.f32 %v354, %v354
          %v363 = vmul.f32 %v355, %v355
          %v364 = vmul.f32 %v356, %v356
          %v365 = vmul.f32 %v357, %v357
          %366 = vadd.xlane.f32.xlu0 %v358
          %v367 = vpop.xlane.xlu0 %366
          %368 = vadd.xlane.f32.xlu0 %v359
          %v369 = vpop.xlane.xlu0 %368
          %370 = vadd.xlane.f32.xlu0 %v360
          %v371 = vpop.xlane.xlu0 %370
          %372 = vadd.xlane.f32.xlu0 %v361
          %v373 = vpop.xlane.xlu0 %372
          %374 = vadd.xlane.f32.xlu0 %v362
          %v375 = vpop.xlane.xlu0 %374
          %376 = vadd.xlane.f32.xlu0 %v363
          %v377 = vpop.xlane.xlu0 %376
          %378 = vadd.xlane.f32.xlu0 %v364
          %v379 = vpop.xlane.xlu0 %378
          %380 = vadd.xlane.f32.xlu0 %v365
          %v381 = vpop.xlane.xlu0 %380
          %v382 = vmul.f32 %v367, %v341
          %v383 = vmul.f32 %v369, %v341
          %v384 = vmul.f32 %v371, %v341
          %v385 = vmul.f32 %v373, %v341
          %v386 = vmul.f32 %v375, %v341
          %v387 = vmul.f32 %v377, %v341
          %v388 = vmul.f32 %v379, %v341
          %v389 = vmul.f32 %v381, %v341
          %v390 = vadd.f32 %v382, 1e-05
          %v391 = vadd.f32 %v383, 1e-05
          %v392 = vadd.f32 %v384, 1e-05
          %v393 = vadd.f32 %v385, 1e-05
          %v394 = vadd.f32 %v386, 1e-05
          %v395 = vadd.f32 %v387, 1e-05
          %v396 = vadd.f32 %v388, 1e-05
          %v397 = vadd.f32 %v389, 1e-05
          %v398 = vrsqrt.pop %v390
          %v399 = vrsqrt.pop %v391
          %v400 = vrsqrt.pop %v392
          %v401 = vrsqrt.pop %v393
          %v402 = vrsqrt.pop %v394
          %v403 = vrsqrt.pop %v395
          %v404 = vrsqrt.pop %v396
          %v405 = vrsqrt.pop %v397
          %v406 = vmul.f32 %v350, %v398
          %v407 = vmul.f32 %v351, %v399
          %v408 = vmul.f32 %v352, %v400
          %v409 = vmul.f32 %v353, %v401
          %v410 = vmul.f32 %v354, %v402
          %v411 = vmul.f32 %v355, %v403
          %v412 = vmul.f32 %v356, %v404
          %v413 = vmul.f32 %v357, %v405
          %v414 = vld [vmem:[%s1] sm:$0x1]
          %v416 = vlaneseq
          %v417 = vshrl.u32 %v416, 7
          %v418 = vsub.s32 0, %v417
          %v419 = vrot.slane %v414, %v418
          %v421 = vmul.f32 %v406, %v419
          %v422 = vmul.f32 %v407, %v419
          %v423 = vmul.f32 %v408, %v419
          %v424 = vmul.f32 %v409, %v419
          %v425 = vmul.f32 %v410, %v419
          %v426 = vmul.f32 %v411, %v419
          %v427 = vmul.f32 %v412, %v419
          %v428 = vmul.f32 %v413, %v419
          %v429 = vld [vmem:[%s2] sm:$0x1]
          %v431 = vlaneseq
          %v432 = vshrl.u32 %v431, 7
          %v433 = vsub.s32 0, %v432
          %v434 = vrot.slane %v429, %v433
          %v436 = vadd.f32 %v421, %v434
          %v437 = vadd.f32 %v422, %v434
          %v438 = vadd.f32 %v423, %v434
          %v439 = vadd.f32 %v424, %v434
          %v440 = vadd.f32 %v425, %v434
          %v441 = vadd.f32 %v426, %v434
          %v442 = vadd.f32 %v427, %v434
          %v443 = vadd.f32 %v428, %v434
          %v444 = vpack.c.bf16 %v437, %v436
          %v445 = vpack.c.bf16 %v439, %v438
          %v446 = vpack.c.bf16 %v441, %v440
          %v447 = vpack.c.bf16 %v443, %v442
          %448 = vst [vmem:[#allocation2] sm:$0xff] %v444
          %449 = vst [vmem:[#allocation2 + $0x8] sm:$0xff] %v445
          %450 = vst [vmem:[#allocation2 + $0x10] sm:$0xff] %v446
          %451 = vst [vmem:[#allocation2 + $0x18] sm:$0xff] %v447
        $region52: #{tpu_custom_call.1} parent=39 // pred_fallthru
          _
        %v452 = vld [vmem:[#allocation2] sm:$0xff]
        %v453 = vld [vmem:[#allocation2 + $0x8] sm:$0xff]
        %v454 = vld [vmem:[#allocation2 + $0x10] sm:$0xff]
        %v455 = vld [vmem:[#allocation2 + $0x18] sm:$0xff]
        %v456 = vld [vmem:[%s272] sm:$0xf]
        %v457 = vld [vmem:[%s272 + $0x4] sm:$0xf]
        %v458 = vld [vmem:[%s272 + $0x8] sm:$0xf]
        %v459 = vld [vmem:[%s272 + $0xc] sm:$0xf]
        %v460 = vld [vmem:[%s272 + $0x10] sm:$0xf]
        %v461 = vld [vmem:[%s272 + $0x14] sm:$0xf]
        %v462 = vld [vmem:[%s272 + $0x18] sm:$0xf]
        %v463 = vld [vmem:[%s272 + $0x1c] sm:$0xf]
        %v464 = vld [vmem:[%s272 + $0x20] sm:$0xf]
        %v465 = vld [vmem:[%s272 + $0x24] sm:$0xf]
        %v466 = vld [vmem:[%s272 + $0x28] sm:$0xf]
        %v467 = vld [vmem:[%s272 + $0x2c] sm:$0xf]
        %v468 = vld [vmem:[%s272 + $0x30] sm:$0xf]
        %v469 = vld [vmem:[%s272 + $0x34] sm:$0xf]
        %v470 = vld [vmem:[%s272 + $0x38] sm:$0xf]
        %v471 = vld [vmem:[%s272 + $0x3c] sm:$0xf]
        %v472 = vld [vmem:[%s310] sm:$0x1]
        %v474 = vlaneseq
        %v475 = vshrl.u32 %v474, 7
        %v476 = vsub.s32 0, %v475
        %v477 = vrot.slane %v472, %v476
        %v495 = vunpack.c.l.b16 %v456
        %v496 = vunpack.c.l.b16 %v457
        %v497 = vunpack.c.l.b16 %v458
        %v498 = vunpack.c.l.b16 %v459
        %v499 = vunpack.c.l.b16 %v460
        %v500 = vunpack.c.l.b16 %v461
        %v501 = vunpack.c.l.b16 %v462
        %v502 = vunpack.c.l.b16 %v463
        %v503 = vunpack.c.l.b16 %v464
        %v504 = vunpack.c.l.b16 %v465
        %v505 = vunpack.c.l.b16 %v466
        %v506 = vunpack.c.l.b16 %v467
        %v507 = vunpack.c.l.b16 %v468
        %v508 = vunpack.c.l.b16 %v469
        %v509 = vunpack.c.l.b16 %v470
        %v510 = vunpack.c.l.b16 %v471
        %v511 = vpack.c.b16 %v496, %v495
        %v512 = vpack.c.b16 %v498, %v497
        %v513 = vpack.c.b16 %v500, %v499
        %v514 = vpack.c.b16 %v502, %v501
        %v515 = vpack.c.b16 %v504, %v503
        %v516 = vpack.c.b16 %v506, %v505
        %v517 = vpack.c.b16 %v508, %v507
        %v518 = vpack.c.b16 %v510, %v509
        %527 = vmatprep.subr.bf16.mxu0 0
        %528 = vmatpush1.bf16.msra.mxu0 %v511
        %529 = vmatprep.subr.bf16.mxu0 0
        %530 = vmatpush1.bf16.msra.mxu0 %v512
        %531 = vmatprep.subr.bf16.mxu0 0
        %532 = vmatpush1.bf16.msra.mxu0 %v513
        %533 = vmatprep.subr.bf16.mxu0 0
        %534 = vmatpush1.bf16.msra.mxu0 %v514
        %535 = vmatprep.subr.bf16.mxu0 0
        %536 = vmatpush1.bf16.msra.mxu0 %v515
        %537 = vmatprep.subr.bf16.mxu0 0
        %538 = vmatpush1.bf16.msra.mxu0 %v516
        %539 = vmatprep.subr.bf16.mxu0 0
        %540 = vmatpush1.bf16.msra.mxu0 %v517
        %541 = vmatprep.subr.bf16.mxu0 0
        %542 = vmatpush1.bf16.msra.mxu0 %v518
        %543 = vmatprep.subr.bf16.mxu0 0
        %544 = vmatpush1.bf16.msra.mxu0 0
        %545 = vmatprep.subr.bf16.mxu0 0
        %546 = vmatpush1.bf16.msra.mxu0 0
        %547 = vmatprep.subr.bf16.mxu0 0
        %548 = vmatpush1.bf16.msra.mxu0 0
        %549 = vmatprep.subr.bf16.mxu0 0
        %550 = vmatpush1.bf16.msra.mxu0 0
        %551 = vmatprep.subr.bf16.mxu0 0
        %552 = vmatpush1.bf16.msra.mxu0 0
        %553 = vmatprep.subr.bf16.mxu0 0
        %554 = vmatpush1.bf16.msra.mxu0 0
        %555 = vmatprep.subr.bf16.mxu0 0
        %556 = vmatpush1.bf16.msra.mxu0 0
        %557 = vmatprep.subr.bf16.mxu0 0
        %558 = vmatpush1.bf16.msra.mxu0 0
        %559 = vmatprep.mubr.bf16.mxu0 0
        %560 = vmatmul.mubr.bf16.gmra.mrb[0].mxu0 %v452
        %v561 = vpop.f32.mrb[0].mxu0
        %v562 = vadd.f32 %v477, %v561
        %v563 = vpop.f32.mrb[0].mxu0
        %v564 = vpop.f32.mrb[0].mxu0
        %v565 = vadd.f32 %v477, %v564
        %v566 = vpop.f32.mrb[0].mxu0
        %567 = vmatprep.mubr.bf16.mxu0 0
        %568 = vmatmul.mubr.bf16.gmra.mrb[0].mxu0 %v453
        %v569 = vpop.f32.mrb[0].mxu0
        %v570 = vadd.f32 %v477, %v569
        %v571 = vpop.f32.mrb[0].mxu0
        %v572 = vpop.f32.mrb[0].mxu0
        %v573 = vadd.f32 %v477, %v572
        %v574 = vpop.f32.mrb[0].mxu0
        %575 = vmatprep.mubr.bf16.mxu0 0
        %576 = vmatmul.mubr.bf16.gmra.mrb[0].mxu0 %v454
        %v577 = vpop.f32.mrb[0].mxu0
        %v578 = vadd.f32 %v477, %v577
        %v579 = vpop.f32.mrb[0].mxu0
        %v580 = vpop.f32.mrb[0].mxu0
        %v581 = vadd.f32 %v477, %v580
        %v582 = vpop.f32.mrb[0].mxu0
        %583 = vmatprep.mubr.bf16.mxu0 0
        %584 = vmatmul.mubr.bf16.gmra.mrb[0].mxu0 %v455
        %v585 = vpop.f32.mrb[0].mxu0
        %v586 = vadd.f32 %v477, %v585
        %v587 = vpop.f32.mrb[0].mxu0
        %v588 = vpop.f32.mrb[0].mxu0
        %v589 = vadd.f32 %v477, %v588
        %v590 = vpop.f32.mrb[0].mxu0
        %591 = vdwg.mxu0
        %592 = vst [vmem:[%s306] sm:$0xff] %v562
        %593 = vst [vmem:[%s306 + $0x8] sm:$0xff] %v565
        %594 = vst [vmem:[%s306 + $0x10] sm:$0xff] %v570
        %595 = vst [vmem:[%s306 + $0x18] sm:$0xff] %v573
        %596 = vst [vmem:[%s306 + $0x20] sm:$0xff] %v578
        %597 = vst [vmem:[%s306 + $0x28] sm:$0xff] %v581
        %598 = vst [vmem:[%s306 + $0x30] sm:$0xff] %v586
        %599 = vst [vmem:[%s306 + $0x38] sm:$0xff] %v589
        %s600 = sand.u32 %s167, 1
        %s601 = scalar_lea.sflag [#allocation5], %s600
        %s602 = sand.u32 %s167, 1
        %s603 = smul.addr %s602, 64
        %s604 = scalar_lea.vmem [#allocation8], %s603
        // Predicated region
        $region53: #{tpu_custom_call.1} parent=39 // pred_check
          %p605 = pneg %p177
        $region54: #{tpu_custom_call.1} parent=39 // pred_check_branch
          %607 = sbr.rel (%p605) target = $region56
        $region55: #{tpu_custom_call.1} parent=39 // pred_region
          %s608 = smul.u32 8, %s29
          %s610 = ssub.s32 1024, 1024
          %611 = vsyncadd %s601, %s610
          %s612 = smul.addr %s608, 3
          %s613 = sadd.s32 %s30, %s612
          %s614 = smul.addr %s613, 128
          %s615 = scalar_lea.hbm %s5, %s614
          %s616 = sshll.u32 %s604, 4
          %s617 = int_to_ptr.vmem [resolvable:$true] %s616
          %622 = dma.vmem_to_hbm [thread:$0]  %s617, 1024, %s615, %s601, 128, 384, 8
        $region56: #{tpu_custom_call.1} parent=39 // pred_fallthru
          _
      $region40: #{tpu_custom_call.1} parent=5 // pred_fallthru
        _
      %p623 = scmp.le.s32.totalorder 2, %s20
      // Predicated region
      $region57: #{tpu_custom_call.1} parent=5 // pred_check
        %p624 = pneg %p623
      $region58: #{tpu_custom_call.1} parent=5 // pred_check_branch
        %626 = sbr.rel (%p624) target = $region60
      $region59: #{tpu_custom_call.1} parent=5 // pred_region
        %s627 = ssub.s32 %s20, 2
        // Predicated region
        $region61: #{tpu_custom_call.1} parent=59 // pred_check
          %p628 = pneg %p183
        $region62: #{tpu_custom_call.1} parent=59 // pred_check_branch
          %630 = sbr.rel (%p628) target = $region64
        $region63: #{tpu_custom_call.1} parent=59 // pred_region
          %s631 = sand.u32 %s168, 1
          %s632 = scalar_lea.sflag [#allocation5], %s631
          %s633 = sand.u32 %s168, 1
          %s634 = smul.addr %s633, 64
          %s635 = scalar_lea.vmem [#allocation8], %s634
          %636 = dma.done %s632, 1024
        $region64: #{tpu_custom_call.1} parent=59 // pred_fallthru
          _
      $region60: #{tpu_custom_call.1} parent=5 // pred_fallthru
        _
    $region6: #{tpu_custom_call.1} parent=1 // loop_footer
      %s24 = sadd.s32 1, %s20
    $region7: #{tpu_custom_call.1} parent=1 // loop_footer_branch
      %19 = sbr.rel target = $region3
    $region8: #{tpu_custom_call.1} parent=1 // loop_exit
      _
    %637 = vsyncpa [#allocation4], 1
    %s638 = scalar_lea.sflag [#allocation4], 1
    %639 = vsyncpa %s638, 1
    %640 = vsyncpa [#allocation7], 1
    %s641 = scalar_lea.sflag [#allocation7], 1
    %642 = vsyncpa %s641, 1
    %643 = vsyncpa [#allocation5], 1
    %s644 = scalar_lea.sflag [#allocation5], 1
    %645 = vsyncpa %s644, 1

</llo_original>
